<compile_context>
chip_gen: v7x
topology: tpu7x:2x2x1
jax: 0.10.0
libtpu: 0.0.40
codegen_flags: <defaults>
</compile_context>

<pallas_src>
import jax
import jax.numpy as jnp
import numpy as np
from jax import lax
from jax.experimental import pallas as pl
from jax.experimental.pallas import tpu as pltpu


def lstm_dqn_kernel(x2d_ref, wih_ref, whh_ref, b_ref, uw_ref, ub_ref, out_ref):
    """Whole forward in one grid-less kernel invocation.

    x2d_ref : (T*B, D)  time-major flattened input; rows [t*B:(t+1)*B] = batch at time t
    wih_ref : (D, 4H)   input->gates weight (transposed)
    whh_ref : (H, 4H)   hidden->gates weight (transposed)
    b_ref   : (1, 4H)   b_ih + b_hh
    uw_ref  : (H, Opad) final linear weight (transposed, lane-padded to 128)
    ub_ref  : (1, Opad) final linear bias (lane-padded)
    out_ref : (B, Opad) padded output (sliced to O in the wrapper)
    """
    H = whh_ref.shape[0]
    H4 = whh_ref.shape[1]
    B = out_ref.shape[0]
    T = x2d_ref.shape[0] // B

    whh = whh_ref[...]          # (H, 4H)
    b = b_ref[...]              # (1, 4H)

    # Per-lane affine for sigmoid(x) = 0.5*tanh(0.5*x) + 0.5 on i/f/o lanes,
    # tanh(x) = 1.0*tanh(1.0*x) + 0.0 on g lanes ([2H, 3H)).
    lane = lax.broadcasted_iota(jnp.int32, (1, H4), dimension=1)
    is_g_lane = (lane >= 2 * H) & (lane < 3 * H)
    scale_row = jnp.where(is_g_lane, 1.0, 0.5).astype(jnp.float32)    # (1, 4H)
    offset_row = jnp.where(is_g_lane, 0.0, 0.5).astype(jnp.float32)   # (1, 4H)
    # Broadcasts hoisted out of the loop (JAX does not CSE broadcast_in_dim).
    scale_b = jnp.broadcast_to(scale_row, (B, H4))
    offset_b = jnp.broadcast_to(offset_row, (B, H4))

    # Input projection for ALL time steps in one 2-D MXU call, bias folded in,
    # pre-scaled once so the per-step path has no extra VPU mul before the tanh.
    x_proj = (jnp.dot(x2d_ref[...], wih_ref[...],
                      preferred_element_type=jnp.float32) + b) * scale_row   # (T*B, 4H)
    whh_s = whh * scale_row                                                  # (H, 4H)

    h = jnp.zeros((B, H), jnp.float32)
    c = jnp.zeros((B, H), jnp.float32)

    # Static unrolled recurrence: literal slice bounds, one EUP tanh per step on the
    # full-width gates vreg plus one tanh on the (B, H) cell output.
    for t in range(T):
        xp_t = x_proj[t * B:(t + 1) * B, :]                            # static sublane slice
        gates_s = xp_t + jnp.dot(h, whh_s, preferred_element_type=jnp.float32)
        act = jnp.tanh(gates_s) * scale_b + offset_b                   # [i, f, g, o]
        i = act[:, 0 * H:1 * H]
        f = act[:, 1 * H:2 * H]
        g = act[:, 2 * H:3 * H]
        o = act[:, 3 * H:4 * H]
        c = f * c + i * g
        h = o * jnp.tanh(c)

    out_ref[...] = (jnp.dot(h, uw_ref[...], preferred_element_type=jnp.float32)
                    + ub_ref[...]).astype(out_ref.dtype)


def lstm_dqn_forward(x, params):
    """x: (B, T, D) float32 -> (B, O) float32.  Equivalent to
    U(LSTM(x, (h0=0, c0=0))[0][:, -1, :]) with a single-layer unidirectional LSTM."""
    B, T, D = x.shape
    w_ih, w_hh, b_ih, b_hh, u_w, u_b = (params[k] for k in
                                        ("w_ih", "w_hh", "b_ih", "b_hh", "u_w", "u_b"))
    H4 = w_ih.shape[0]
    H = H4 // 4
    O = u_w.shape[0]
    O_pad = max(128, ((O + 127) // 128) * 128)      # lane-dense output store

    # Layout plumbing (not compute hoisting): time-major 2-D view of x so the kernel's
    # per-step extraction is a contiguous static row slice.
    x2d = jnp.transpose(x, (1, 0, 2)).reshape(T * B, D)

    wih_t = jnp.transpose(w_ih)                     # (D, 4H)
    whh_t = jnp.transpose(w_hh)                     # (H, 4H)
    b = (b_ih + b_hh).reshape(1, H4)                # (1, 4H)
    uw_t = jnp.zeros((H, O_pad), jnp.float32).at[:, :O].set(jnp.transpose(u_w))
    ub = jnp.zeros((1, O_pad), jnp.float32).at[:, :O].set(u_b.reshape(1, O))

    vmem_spec = pl.BlockSpec(memory_space=pltpu.MemorySpace.VMEM)
    out_padded = pl.pallas_call(
        lstm_dqn_kernel,
        out_shape=jax.ShapeDtypeStruct((B, O_pad), jnp.float32),
        in_specs=[vmem_spec] * 6,                   # whole arrays VMEM-resident, no pipeline
        out_specs=vmem_spec,
    )(x2d, wih_t, whh_t, b, uw_t, ub)

    return out_padded[:, :O]


def reference_forward(x, params):
    """Pure-JAX reference of the PyTorch forward (single layer, unidirectional)."""
    w_ih, w_hh, b_ih, b_hh, u_w, u_b = (params[k] for k in
                                        ("w_ih", "w_hh", "b_ih", "b_hh", "u_w", "u_b"))
    B, T, D = x.shape
    H = w_hh.shape[1]

    def step(carry, x_t):
        h, c = carry
        gates = x_t @ w_ih.T + b_ih + h @ w_hh.T + b_hh
        i = jax.nn.sigmoid(gates[:, 0 * H:1 * H])
        f = jax.nn.sigmoid(gates[:, 1 * H:2 * H])
        g = jnp.tanh(gates[:, 2 * H:3 * H])
        o = jax.nn.sigmoid(gates[:, 3 * H:4 * H])
        c = f * c + i * g
        h = o * jnp.tanh(c)
        return (h, c), None

    h0 = jnp.zeros((B, H), jnp.float32)
    c0 = jnp.zeros((B, H), jnp.float32)
    (hT, _), _ = lax.scan(step, (h0, c0), jnp.transpose(x, (1, 0, 2)))
    return hT @ u_w.T + u_b


def init_params(key, input_dim, hidden_dim, output_dim):
    """Deterministic synthetic params mirroring __init__ shapes: orthogonal matrices,
    small uniform biases (matches the module's orthogonal init on 2-D params)."""
    ks = jax.random.split(key, 6)
    ortho = jax.nn.initializers.orthogonal()
    bound = 1.0 / np.sqrt(hidden_dim)
    return {
        "w_ih": ortho(ks[0], (4 * hidden_dim, input_dim), jnp.float32),
        "w_hh": ortho(ks[1], (4 * hidden_dim, hidden_dim), jnp.float32),
        "b_ih": jax.random.uniform(ks[2], (4 * hidden_dim,), jnp.float32, -bound, bound),
        "b_hh": jax.random.uniform(ks[3], (4 * hidden_dim,), jnp.float32, -bound, bound),
        "u_w": ortho(ks[4], (output_dim, hidden_dim), jnp.float32),
        "u_b": jax.random.uniform(ks[5], (output_dim,), jnp.float32, -bound, bound),
    }


if __name__ == "__main__":
    # config = dict(input_dim=16, hidden_dim=32, output_dim=8, num_layers=1, bidirectional=False)
    B, T, D, H, O = 2, 8, 16, 32, 8

    key = jax.random.PRNGKey(0)
    k_x, k_p = jax.random.split(key)
    x = jax.random.normal(k_x, (B, T, D), jnp.float32)
    params = init_params(k_p, D, H, O)

    out = lstm_dqn_forward(x, params)
    out = jax.block_until_ready(out)

    ref = jax.block_until_ready(reference_forward(x, params))
    assert out.shape == (B, O)
    np.testing.assert_allclose(np.asarray(out), np.asarray(ref), rtol=1e-5, atol=1e-5)

    print("KERNEL_OK")
</pallas_src>

<mosaic_0001>
module attributes {stable_mosaic.version = 11 : i64} {
  func.func @lstm_dqn_kernel(%arg0: memref<16x16xf32, #tpu.memory_space<vmem>>, %arg1: memref<16x128xf32, #tpu.memory_space<vmem>>, %arg2: memref<32x128xf32, #tpu.memory_space<vmem>>, %arg3: memref<1x128xf32, #tpu.memory_space<vmem>>, %arg4: memref<32x128xf32, #tpu.memory_space<vmem>>, %arg5: memref<1x128xf32, #tpu.memory_space<vmem>>, %arg6: memref<2x128xf32, #tpu.memory_space<vmem>>) attributes {dimension_semantics = [], scalar_prefetch = 0 : i64, scratch_operands = 0 : i64, tpu.core_type = #tpu.core_type<tc>} {
    %c0 = arith.constant 0 : index
    %c0_0 = arith.constant 0 : index
    %0 = vector.load %arg2[%c0, %c0_0] : memref<32x128xf32, #tpu.memory_space<vmem>>, vector<32x128xf32>
    %c0_1 = arith.constant 0 : index
    %c0_2 = arith.constant 0 : index
    %1 = vector.load %arg3[%c0_1, %c0_2] : memref<1x128xf32, #tpu.memory_space<vmem>>, vector<1x128xf32>
    %2 = tpu.iota {dimensions = array<i32: 1>} : vector<1x128xi32>
    %c64_i32 = arith.constant 64 : i32
    %3 = vector.broadcast %c64_i32 : i32 to vector<1x128xi32>
    %4 = arith.cmpi sge, %2, %3 : vector<1x128xi32>
    %c96_i32 = arith.constant 96 : i32
    %5 = vector.broadcast %c96_i32 : i32 to vector<1x128xi32>
    %6 = arith.cmpi slt, %2, %5 : vector<1x128xi32>
    %7 = arith.andi %4, %6 : vector<1x128xi1>
    %cst = arith.constant 1.000000e+00 : f32
    %cst_3 = arith.constant 5.000000e-01 : f32
    %8 = vector.broadcast %cst : f32 to vector<1x128xf32>
    %9 = vector.broadcast %cst_3 : f32 to vector<1x128xf32>
    %10 = arith.select %7, %8, %9 : vector<1x128xi1>, vector<1x128xf32>
    %cst_4 = arith.constant 0.000000e+00 : f32
    %cst_5 = arith.constant 5.000000e-01 : f32
    %11 = vector.broadcast %cst_4 : f32 to vector<1x128xf32>
    %12 = vector.broadcast %cst_5 : f32 to vector<1x128xf32>
    %13 = arith.select %7, %11, %12 : vector<1x128xi1>, vector<1x128xf32>
    %14 = vector.shape_cast %10 : vector<1x128xf32> to vector<1x128xf32>
    %15 = vector.broadcast %14 : vector<1x128xf32> to vector<2x128xf32>
    %16 = vector.shape_cast %13 : vector<1x128xf32> to vector<1x128xf32>
    %17 = vector.broadcast %16 : vector<1x128xf32> to vector<2x128xf32>
    %c0_6 = arith.constant 0 : index
    %c0_7 = arith.constant 0 : index
    %18 = vector.load %arg0[%c0_6, %c0_7] : memref<16x16xf32, #tpu.memory_space<vmem>>, vector<16x16xf32>
    %c0_8 = arith.constant 0 : index
    %c0_9 = arith.constant 0 : index
    %19 = vector.load %arg1[%c0_8, %c0_9] : memref<16x128xf32, #tpu.memory_space<vmem>>, vector<16x128xf32>
    %cst_10 = arith.constant dense<0.000000e+00> : vector<16x128xf32>
    %20 = tpu.matmul %18, %19, %cst_10 {dimension_numbers = #tpu.dot_dimension_numbers<[1], [0], [0], [1], [0, 0, 1, 1], [], []>} : vector<16x16xf32>, vector<16x128xf32>, vector<16x128xf32> -> vector<16x128xf32>
    %21 = vector.broadcast %1 : vector<1x128xf32> to vector<16x128xf32>
    %22 = arith.addf %20, %21 : vector<16x128xf32>
    %23 = vector.broadcast %10 : vector<1x128xf32> to vector<16x128xf32>
    %24 = arith.mulf %22, %23 : vector<16x128xf32>
    %25 = vector.broadcast %10 : vector<1x128xf32> to vector<32x128xf32>
    %26 = arith.mulf %0, %25 : vector<32x128xf32>
    %cst_11 = arith.constant 0.000000e+00 : f32
    %27 = vector.broadcast %cst_11 : f32 to vector<2x32xf32>
    %cst_12 = arith.constant 0.000000e+00 : f32
    %28 = vector.broadcast %cst_12 : f32 to vector<2x32xf32>
    %29 = vector.extract_strided_slice %24 {offsets = [0, 0], sizes = [2, 128], strides = [1, 1]} : vector<16x128xf32> to vector<2x128xf32>
    %cst_13 = arith.constant dense<0.000000e+00> : vector<2x128xf32>
    %30 = tpu.matmul %27, %26, %cst_13 {dimension_numbers = #tpu.dot_dimension_numbers<[1], [0], [0], [1], [0, 0, 1, 1], [], []>} : vector<2x32xf32>, vector<32x128xf32>, vector<2x128xf32> -> vector<2x128xf32>
    %31 = arith.addf %29, %30 : vector<2x128xf32>
    %32 = math.tanh %31 : vector<2x128xf32>
    %33 = arith.mulf %32, %15 : vector<2x128xf32>
    %34 = arith.addf %33, %17 : vector<2x128xf32>
    %35 = vector.extract_strided_slice %34 {offsets = [0, 0], sizes = [2, 32], strides = [1, 1]} : vector<2x128xf32> to vector<2x32xf32>
    %36 = vector.extract_strided_slice %34 {offsets = [0, 32], sizes = [2, 32], strides = [1, 1]} : vector<2x128xf32> to vector<2x32xf32>
    %37 = vector.extract_strided_slice %34 {offsets = [0, 64], sizes = [2, 32], strides = [1, 1]} : vector<2x128xf32> to vector<2x32xf32>
    %38 = vector.extract_strided_slice %34 {offsets = [0, 96], sizes = [2, 32], strides = [1, 1]} : vector<2x128xf32> to vector<2x32xf32>
    %39 = arith.mulf %36, %28 : vector<2x32xf32>
    %40 = arith.mulf %35, %37 : vector<2x32xf32>
    %41 = arith.addf %39, %40 : vector<2x32xf32>
    %42 = math.tanh %41 : vector<2x32xf32>
    %43 = arith.mulf %38, %42 : vector<2x32xf32>
    %44 = vector.extract_strided_slice %24 {offsets = [2, 0], sizes = [2, 128], strides = [1, 1]} : vector<16x128xf32> to vector<2x128xf32>
    %cst_14 = arith.constant dense<0.000000e+00> : vector<2x128xf32>
    %45 = tpu.matmul %43, %26, %cst_14 {dimension_numbers = #tpu.dot_dimension_numbers<[1], [0], [0], [1], [0, 0, 1, 1], [], []>} : vector<2x32xf32>, vector<32x128xf32>, vector<2x128xf32> -> vector<2x128xf32>
    %46 = arith.addf %44, %45 : vector<2x128xf32>
    %47 = math.tanh %46 : vector<2x128xf32>
    %48 = arith.mulf %47, %15 : vector<2x128xf32>
    %49 = arith.addf %48, %17 : vector<2x128xf32>
    %50 = vector.extract_strided_slice %49 {offsets = [0, 0], sizes = [2, 32], strides = [1, 1]} : vector<2x128xf32> to vector<2x32xf32>
    %51 = vector.extract_strided_slice %49 {offsets = [0, 32], sizes = [2, 32], strides = [1, 1]} : vector<2x128xf32> to vector<2x32xf32>
    %52 = vector.extract_strided_slice %49 {offsets = [0, 64], sizes = [2, 32], strides = [1, 1]} : vector<2x128xf32> to vector<2x32xf32>
    %53 = vector.extract_strided_slice %49 {offsets = [0, 96], sizes = [2, 32], strides = [1, 1]} : vector<2x128xf32> to vector<2x32xf32>
    %54 = arith.mulf %51, %41 : vector<2x32xf32>
    %55 = arith.mulf %50, %52 : vector<2x32xf32>
    %56 = arith.addf %54, %55 : vector<2x32xf32>
    %57 = math.tanh %56 : vector<2x32xf32>
    %58 = arith.mulf %53, %57 : vector<2x32xf32>
    %59 = vector.extract_strided_slice %24 {offsets = [4, 0], sizes = [2, 128], strides = [1, 1]} : vector<16x128xf32> to vector<2x128xf32>
    %cst_15 = arith.constant dense<0.000000e+00> : vector<2x128xf32>
    %60 = tpu.matmul %58, %26, %cst_15 {dimension_numbers = #tpu.dot_dimension_numbers<[1], [0], [0], [1], [0, 0, 1, 1], [], []>} : vector<2x32xf32>, vector<32x128xf32>, vector<2x128xf32> -> vector<2x128xf32>
    %61 = arith.addf %59, %60 : vector<2x128xf32>
    %62 = math.tanh %61 : vector<2x128xf32>
    %63 = arith.mulf %62, %15 : vector<2x128xf32>
    %64 = arith.addf %63, %17 : vector<2x128xf32>
    %65 = vector.extract_strided_slice %64 {offsets = [0, 0], sizes = [2, 32], strides = [1, 1]} : vector<2x128xf32> to vector<2x32xf32>
    %66 = vector.extract_strided_slice %64 {offsets = [0, 32], sizes = [2, 32], strides = [1, 1]} : vector<2x128xf32> to vector<2x32xf32>
    %67 = vector.extract_strided_slice %64 {offsets = [0, 64], sizes = [2, 32], strides = [1, 1]} : vector<2x128xf32> to vector<2x32xf32>
    %68 = vector.extract_strided_slice %64 {offsets = [0, 96], sizes = [2, 32], strides = [1, 1]} : vector<2x128xf32> to vector<2x32xf32>
    %69 = arith.mulf %66, %56 : vector<2x32xf32>
    %70 = arith.mulf %65, %67 : vector<2x32xf32>
    %71 = arith.addf %69, %70 : vector<2x32xf32>
    %72 = math.tanh %71 : vector<2x32xf32>
    %73 = arith.mulf %68, %72 : vector<2x32xf32>
    %74 = vector.extract_strided_slice %24 {offsets = [6, 0], sizes = [2, 128], strides = [1, 1]} : vector<16x128xf32> to vector<2x128xf32>
    %cst_16 = arith.constant dense<0.000000e+00> : vector<2x128xf32>
    %75 = tpu.matmul %73, %26, %cst_16 {dimension_numbers = #tpu.dot_dimension_numbers<[1], [0], [0], [1], [0, 0, 1, 1], [], []>} : vector<2x32xf32>, vector<32x128xf32>, vector<2x128xf32> -> vector<2x128xf32>
    %76 = arith.addf %74, %75 : vector<2x128xf32>
    %77 = math.tanh %76 : vector<2x128xf32>
    %78 = arith.mulf %77, %15 : vector<2x128xf32>
    %79 = arith.addf %78, %17 : vector<2x128xf32>
    %80 = vector.extract_strided_slice %79 {offsets = [0, 0], sizes = [2, 32], strides = [1, 1]} : vector<2x128xf32> to vector<2x32xf32>
    %81 = vector.extract_strided_slice %79 {offsets = [0, 32], sizes = [2, 32], strides = [1, 1]} : vector<2x128xf32> to vector<2x32xf32>
    %82 = vector.extract_strided_slice %79 {offsets = [0, 64], sizes = [2, 32], strides = [1, 1]} : vector<2x128xf32> to vector<2x32xf32>
    %83 = vector.extract_strided_slice %79 {offsets = [0, 96], sizes = [2, 32], strides = [1, 1]} : vector<2x128xf32> to vector<2x32xf32>
    %84 = arith.mulf %81, %71 : vector<2x32xf32>
    %85 = arith.mulf %80, %82 : vector<2x32xf32>
    %86 = arith.addf %84, %85 : vector<2x32xf32>
    %87 = math.tanh %86 : vector<2x32xf32>
    %88 = arith.mulf %83, %87 : vector<2x32xf32>
    %89 = vector.extract_strided_slice %24 {offsets = [8, 0], sizes = [2, 128], strides = [1, 1]} : vector<16x128xf32> to vector<2x128xf32>
    %cst_17 = arith.constant dense<0.000000e+00> : vector<2x128xf32>
    %90 = tpu.matmul %88, %26, %cst_17 {dimension_numbers = #tpu.dot_dimension_numbers<[1], [0], [0], [1], [0, 0, 1, 1], [], []>} : vector<2x32xf32>, vector<32x128xf32>, vector<2x128xf32> -> vector<2x128xf32>
    %91 = arith.addf %89, %90 : vector<2x128xf32>
    %92 = math.tanh %91 : vector<2x128xf32>
    %93 = arith.mulf %92, %15 : vector<2x128xf32>
    %94 = arith.addf %93, %17 : vector<2x128xf32>
    %95 = vector.extract_strided_slice %94 {offsets = [0, 0], sizes = [2, 32], strides = [1, 1]} : vector<2x128xf32> to vector<2x32xf32>
    %96 = vector.extract_strided_slice %94 {offsets = [0, 32], sizes = [2, 32], strides = [1, 1]} : vector<2x128xf32> to vector<2x32xf32>
    %97 = vector.extract_strided_slice %94 {offsets = [0, 64], sizes = [2, 32], strides = [1, 1]} : vector<2x128xf32> to vector<2x32xf32>
    %98 = vector.extract_strided_slice %94 {offsets = [0, 96], sizes = [2, 32], strides = [1, 1]} : vector<2x128xf32> to vector<2x32xf32>
    %99 = arith.mulf %96, %86 : vector<2x32xf32>
    %100 = arith.mulf %95, %97 : vector<2x32xf32>
    %101 = arith.addf %99, %100 : vector<2x32xf32>
    %102 = math.tanh %101 : vector<2x32xf32>
    %103 = arith.mulf %98, %102 : vector<2x32xf32>
    %104 = vector.extract_strided_slice %24 {offsets = [10, 0], sizes = [2, 128], strides = [1, 1]} : vector<16x128xf32> to vector<2x128xf32>
    %cst_18 = arith.constant dense<0.000000e+00> : vector<2x128xf32>
    %105 = tpu.matmul %103, %26, %cst_18 {dimension_numbers = #tpu.dot_dimension_numbers<[1], [0], [0], [1], [0, 0, 1, 1], [], []>} : vector<2x32xf32>, vector<32x128xf32>, vector<2x128xf32> -> vector<2x128xf32>
    %106 = arith.addf %104, %105 : vector<2x128xf32>
    %107 = math.tanh %106 : vector<2x128xf32>
    %108 = arith.mulf %107, %15 : vector<2x128xf32>
    %109 = arith.addf %108, %17 : vector<2x128xf32>
    %110 = vector.extract_strided_slice %109 {offsets = [0, 0], sizes = [2, 32], strides = [1, 1]} : vector<2x128xf32> to vector<2x32xf32>
    %111 = vector.extract_strided_slice %109 {offsets = [0, 32], sizes = [2, 32], strides = [1, 1]} : vector<2x128xf32> to vector<2x32xf32>
    %112 = vector.extract_strided_slice %109 {offsets = [0, 64], sizes = [2, 32], strides = [1, 1]} : vector<2x128xf32> to vector<2x32xf32>
    %113 = vector.extract_strided_slice %109 {offsets = [0, 96], sizes = [2, 32], strides = [1, 1]} : vector<2x128xf32> to vector<2x32xf32>
    %114 = arith.mulf %111, %101 : vector<2x32xf32>
    %115 = arith.mulf %110, %112 : vector<2x32xf32>
    %116 = arith.addf %114, %115 : vector<2x32xf32>
    %117 = math.tanh %116 : vector<2x32xf32>
    %118 = arith.mulf %113, %117 : vector<2x32xf32>
    %119 = vector.extract_strided_slice %24 {offsets = [12, 0], sizes = [2, 128], strides = [1, 1]} : vector<16x128xf32> to vector<2x128xf32>
    %cst_19 = arith.constant dense<0.000000e+00> : vector<2x128xf32>
    %120 = tpu.matmul %118, %26, %cst_19 {dimension_numbers = #tpu.dot_dimension_numbers<[1], [0], [0], [1], [0, 0, 1, 1], [], []>} : vector<2x32xf32>, vector<32x128xf32>, vector<2x128xf32> -> vector<2x128xf32>
    %121 = arith.addf %119, %120 : vector<2x128xf32>
    %122 = math.tanh %121 : vector<2x128xf32>
    %123 = arith.mulf %122, %15 : vector<2x128xf32>
    %124 = arith.addf %123, %17 : vector<2x128xf32>
    %125 = vector.extract_strided_slice %124 {offsets = [0, 0], sizes = [2, 32], strides = [1, 1]} : vector<2x128xf32> to vector<2x32xf32>
    %126 = vector.extract_strided_slice %124 {offsets = [0, 32], sizes = [2, 32], strides = [1, 1]} : vector<2x128xf32> to vector<2x32xf32>
    %127 = vector.extract_strided_slice %124 {offsets = [0, 64], sizes = [2, 32], strides = [1, 1]} : vector<2x128xf32> to vector<2x32xf32>
    %128 = vector.extract_strided_slice %124 {offsets = [0, 96], sizes = [2, 32], strides = [1, 1]} : vector<2x128xf32> to vector<2x32xf32>
    %129 = arith.mulf %126, %116 : vector<2x32xf32>
    %130 = arith.mulf %125, %127 : vector<2x32xf32>
    %131 = arith.addf %129, %130 : vector<2x32xf32>
    %132 = math.tanh %131 : vector<2x32xf32>
    %133 = arith.mulf %128, %132 : vector<2x32xf32>
    %134 = vector.extract_strided_slice %24 {offsets = [14, 0], sizes = [2, 128], strides = [1, 1]} : vector<16x128xf32> to vector<2x128xf32>
    %cst_20 = arith.constant dense<0.000000e+00> : vector<2x128xf32>
    %135 = tpu.matmul %133, %26, %cst_20 {dimension_numbers = #tpu.dot_dimension_numbers<[1], [0], [0], [1], [0, 0, 1, 1], [], []>} : vector<2x32xf32>, vector<32x128xf32>, vector<2x128xf32> -> vector<2x128xf32>
    %136 = arith.addf %134, %135 : vector<2x128xf32>
    %137 = math.tanh %136 : vector<2x128xf32>
    %138 = arith.mulf %137, %15 : vector<2x128xf32>
    %139 = arith.addf %138, %17 : vector<2x128xf32>
    %140 = vector.extract_strided_slice %139 {offsets = [0, 0], sizes = [2, 32], strides = [1, 1]} : vector<2x128xf32> to vector<2x32xf32>
    %141 = vector.extract_strided_slice %139 {offsets = [0, 32], sizes = [2, 32], strides = [1, 1]} : vector<2x128xf32> to vector<2x32xf32>
    %142 = vector.extract_strided_slice %139 {offsets = [0, 64], sizes = [2, 32], strides = [1, 1]} : vector<2x128xf32> to vector<2x32xf32>
    %143 = vector.extract_strided_slice %139 {offsets = [0, 96], sizes = [2, 32], strides = [1, 1]} : vector<2x128xf32> to vector<2x32xf32>
    %144 = arith.mulf %141, %131 : vector<2x32xf32>
    %145 = arith.mulf %140, %142 : vector<2x32xf32>
    %146 = arith.addf %144, %145 : vector<2x32xf32>
    %147 = math.tanh %146 : vector<2x32xf32>
    %148 = arith.mulf %143, %147 : vector<2x32xf32>
    %c0_21 = arith.constant 0 : index
    %c0_22 = arith.constant 0 : index
    %149 = vector.load %arg4[%c0_21, %c0_22] : memref<32x128xf32, #tpu.memory_space<vmem>>, vector<32x128xf32>
    %cst_23 = arith.constant dense<0.000000e+00> : vector<2x128xf32>
    %150 = tpu.matmul %148, %149, %cst_23 {dimension_numbers = #tpu.dot_dimension_numbers<[1], [0], [0], [1], [0, 0, 1, 1], [], []>} : vector<2x32xf32>, vector<32x128xf32>, vector<2x128xf32> -> vector<2x128xf32>
    %c0_24 = arith.constant 0 : index
    %c0_25 = arith.constant 0 : index
    %151 = vector.load %arg5[%c0_24, %c0_25] : memref<1x128xf32, #tpu.memory_space<vmem>>, vector<1x128xf32>
    %152 = vector.broadcast %151 : vector<1x128xf32> to vector<2x128xf32>
    %153 = arith.addf %150, %152 : vector<2x128xf32>
    %c0_26 = arith.constant 0 : index
    %c0_27 = arith.constant 0 : index
    %154 = vector.load %arg6[%c0_26, %c0_27] : memref<2x128xf32, #tpu.memory_space<vmem>>, vector<2x128xf32>
    tpu.vector_store %arg6[%c0_26, %c0_27], %153 {strides = array<i32>} : memref<2x128xf32, #tpu.memory_space<vmem>>, vector<2x128xf32>,
    return
  }
}

</mosaic_0001>

<llo_original>
// kernel: tpu_custom_call.1
$region0: #{tpu_custom_call.1}
  #allocation0 [shape = 'u32[]', space=smem, size = 0x4, offset = 0x4, fixed_abs, tag = 'smem constant byte address 0x4 - core index']
  #allocation1 [shape = 'u32[144,128]{1,0:T(1,128)}', space=vmem, size = 0x12000, scoped, tag = 'internal scratch']
  %s0 = inlined_call_operand.hbm [shape: f32[16,16], index: 0, kind: input, shape index: {}]
  %s1 = inlined_call_operand.hbm [shape: f32[16,128], index: 1, kind: input, shape index: {}]
  %s2 = inlined_call_operand.hbm [shape: f32[32,128], index: 2, kind: input, shape index: {}]
  %s3 = inlined_call_operand.vmem [shape: f32[1,128], index: 3, kind: input, shape index: {}]
  %s4 = inlined_call_operand.hbm [shape: f32[32,128], index: 4, kind: input, shape index: {}]
  %s5 = inlined_call_operand.vmem [shape: f32[1,128], index: 5, kind: input, shape index: {}]
  %s6 = inlined_call_operand.hbm [shape: f32[2,128], index: 6, kind: output, shape index: {}]
  %s7 = sld [smem:[#allocation0]]
  $region50: #{tpu_custom_call.1} parent=0
    _
  %s9 = ssub.s32 1, %s7
  %s10 = scalar_select 0, %s9, %s7
  $region1: #{tpu_custom_call.1} parent=0
    #allocation2 [shape = 'u8[8192]{0}', space=vmem, size = 0x2000, scoped, tag = 'input window, operand 0, single buffered']
    #allocation3 [shape = 's32[1]{0}', space=sflag, size = 0x4, scoped, tag = 'scoped memory for tpu_custom_call.1']
    #allocation4 [shape = 's32[1]{0}', space=sflag, size = 0x4, scoped, tag = 'scoped memory for tpu_custom_call.1']
    #allocation5 [shape = 'u8[8192]{0}', space=vmem, size = 0x2000, scoped, tag = 'input window, operand 1, single buffered']
    #allocation6 [shape = 's32[1]{0}', space=sflag, size = 0x4, scoped, tag = 'scoped memory for tpu_custom_call.1']
    #allocation7 [shape = 'u8[16384]{0}', space=vmem, size = 0x4000, scoped, tag = 'input window, operand 2, single buffered']
    #allocation8 [shape = 'u8[16384]{0}', space=vmem, size = 0x4000, scoped, tag = 'input window, operand 4, single buffered']
    #allocation9 [shape = 's32[1]{0}', space=sflag, size = 0x4, scoped, tag = 'scoped memory for tpu_custom_call.1']
    #allocation10 [shape = 'u8[1024]{0}', space=vmem, size = 0x400, scoped, tag = 'output window, operand 0, single buffered']
    %11 = vsyncpa [#allocation3], 0
    %12 = vsyncpa [#allocation6], 0
    %13 = vsyncpa [#allocation9], 0
    %14 = vsyncpa [#allocation4], 0
    // Predicated region
    $region2: #{tpu_custom_call.1} parent=1 // pred_check
      _
    $region3: #{tpu_custom_call.1} parent=1 // pred_check_branch
      %16 = sbr.rel (0) target = $region5
    $region4: #{tpu_custom_call.1} parent=1 // pred_region
      %s18 = ssub.s32 256, 256
      %19 = vsyncadd [#allocation3], %s18
      %s20 = sshll.u32 [#allocation2], 4
      %s21 = int_to_ptr.vmem [resolvable:$true] %s20
      %26 = dma.hbm_to_vmem [thread:$0]  %s0, 256, %s21, [#allocation3], 128, 128, 8
    $region5: #{tpu_custom_call.1} parent=1 // pred_fallthru
      _
    // Predicated region
    $region6: #{tpu_custom_call.1} parent=1 // pred_check
      _
    $region7: #{tpu_custom_call.1} parent=1 // pred_check_branch
      %28 = sbr.rel (0) target = $region9
    $region8: #{tpu_custom_call.1} parent=1 // pred_region
      %s30 = ssub.s32 256, 256
      %31 = vsyncadd [#allocation6], %s30
      %s32 = sshll.u32 [#allocation5], 4
      %s33 = int_to_ptr.vmem [resolvable:$true] %s32
      %38 = dma.hbm_to_vmem [thread:$0]  %s1, 256, %s33, [#allocation6], 128, 128, 8
    $region9: #{tpu_custom_call.1} parent=1 // pred_fallthru
      _
    // Predicated region
    $region10: #{tpu_custom_call.1} parent=1 // pred_check
      _
    $region11: #{tpu_custom_call.1} parent=1 // pred_check_branch
      %40 = sbr.rel (0) target = $region13
    $region12: #{tpu_custom_call.1} parent=1 // pred_region
      %s42 = ssub.s32 512, 512
      %43 = vsyncadd [#allocation6], %s42
      %s44 = sshll.u32 [#allocation7], 4
      %s45 = int_to_ptr.vmem [resolvable:$true] %s44
      %50 = dma.hbm_to_vmem [thread:$0]  %s2, 512, %s45, [#allocation6], 128, 128, 8
    $region13: #{tpu_custom_call.1} parent=1 // pred_fallthru
      _
    // Predicated region
    $region14: #{tpu_custom_call.1} parent=1 // pred_check
      _
    $region15: #{tpu_custom_call.1} parent=1 // pred_check_branch
      %52 = sbr.rel (0) target = $region17
    $region16: #{tpu_custom_call.1} parent=1 // pred_region
      _
    $region17: #{tpu_custom_call.1} parent=1 // pred_fallthru
      _
    // Predicated region
    $region18: #{tpu_custom_call.1} parent=1 // pred_check
      _
    $region19: #{tpu_custom_call.1} parent=1 // pred_check_branch
      %54 = sbr.rel (0) target = $region21
    $region20: #{tpu_custom_call.1} parent=1 // pred_region
      %s56 = ssub.s32 512, 512
      %57 = vsyncadd [#allocation9], %s56
      %s58 = sshll.u32 [#allocation8], 4
      %s59 = int_to_ptr.vmem [resolvable:$true] %s58
      %64 = dma.hbm_to_vmem [thread:$0]  %s4, 512, %s59, [#allocation9], 128, 128, 8
    $region21: #{tpu_custom_call.1} parent=1 // pred_fallthru
      _
    // Predicated region
    $region22: #{tpu_custom_call.1} parent=1 // pred_check
      _
    $region23: #{tpu_custom_call.1} parent=1 // pred_check_branch
      %66 = sbr.rel (0) target = $region25
    $region24: #{tpu_custom_call.1} parent=1 // pred_region
      _
    $region25: #{tpu_custom_call.1} parent=1 // pred_fallthru
      _
    // Predicated region
    $region26: #{tpu_custom_call.1} parent=1 // pred_check
      _
    $region27: #{tpu_custom_call.1} parent=1 // pred_check_branch
      %68 = sbr.rel (0) target = $region29
    $region28: #{tpu_custom_call.1} parent=1 // pred_region
      %69 = dma.done [#allocation3], 256
    $region29: #{tpu_custom_call.1} parent=1 // pred_fallthru
      _
    // Predicated region
    $region30: #{tpu_custom_call.1} parent=1 // pred_check
      _
    $region31: #{tpu_custom_call.1} parent=1 // pred_check_branch
      %71 = sbr.rel (0) target = $region33
    $region32: #{tpu_custom_call.1} parent=1 // pred_region
      %72 = dma.done [#allocation6], 256
    $region33: #{tpu_custom_call.1} parent=1 // pred_fallthru
      _
    // Predicated region
    $region34: #{tpu_custom_call.1} parent=1 // pred_check
      _
    $region35: #{tpu_custom_call.1} parent=1 // pred_check_branch
      %74 = sbr.rel (0) target = $region37
    $region36: #{tpu_custom_call.1} parent=1 // pred_region
      %75 = dma.done [#allocation6], 512
    $region37: #{tpu_custom_call.1} parent=1 // pred_fallthru
      _
    // Predicated region
    $region38: #{tpu_custom_call.1} parent=1 // pred_check
      _
    $region39: #{tpu_custom_call.1} parent=1 // pred_check_branch
      %77 = sbr.rel (0) target = $region41
    $region40: #{tpu_custom_call.1} parent=1 // pred_region
      %78 = dma.done [#allocation9], 512
    $region41: #{tpu_custom_call.1} parent=1 // pred_fallthru
      _
    %v79 = vld [vmem:[#allocation7] sm:$0xff]
    %v80 = vld [vmem:[#allocation7 + $0x8] sm:$0xff]
    %v81 = vld [vmem:[#allocation7 + $0x10] sm:$0xff]
    %v82 = vld [vmem:[#allocation7 + $0x18] sm:$0xff]
    %v83 = vld [vmem:[%s3] sm:$0x1]
    %v84 = vlaneseq
    %v85 = vand.u32 %v84, 127
    %vm86 = vcmp.ge.s32.totalorder %v85, 64
    %vm87 = vcmp.lt.s32.totalorder %v85, 96
    %vm88 = vmand %vm86, %vm87
    %v89 = vsel %vm88, 1.0, 0.5
    %v90 = vsel %vm88, 0.0, 0.5
    %v91 = vld [vmem:[#allocation2] sm:$0xff]
    %v92 = vld [vmem:[#allocation2 + $0x8] sm:$0xff]
    %v93 = vld [vmem:[#allocation5] sm:$0xff]
    %v94 = vld [vmem:[#allocation5 + $0x8] sm:$0xff]
    %v96 = vlaneseq
    %v97 = vshrl.u32 %v96, 7
    %v98 = vsub.s32 0, %v97
    %v99 = vrot.slane %v83, %v98
    %vm101 = vcmask 130048
    %v103 = vsel %vm101, %v91, 0
    %v106 = vsel %vm101, %v92, 0
    %108 = vmatprep.subr.mxu0 0.0
    %109 = vmatpush1.msra.mxu0 %v93
    %110 = vmatprep.subr.mxu0 0.0
    %111 = vmatpush1.msra.mxu0 %v94
    %112 = vmatprep.subr.mxu0 0.0
    %113 = vmatpush1.msra.mxu0 0.0
    %114 = vmatprep.subr.mxu0 0.0
    %115 = vmatpush1.msra.mxu0 0.0
    %116 = vmatprep.subr.mxu0 0.0
    %117 = vmatpush1.msra.mxu0 0.0
    %118 = vmatprep.subr.mxu0 0.0
    %119 = vmatpush1.msra.mxu0 0.0
    %120 = vmatprep.subr.mxu0 0.0
    %121 = vmatpush1.msra.mxu0 0.0
    %122 = vmatprep.subr.mxu0 0.0
    %123 = vmatpush1.msra.mxu0 0.0
    %124 = vmatprep.subr.mxu0 0.0
    %125 = vmatpush1.msra.mxu0 0.0
    %126 = vmatprep.subr.mxu0 0.0
    %127 = vmatpush1.msra.mxu0 0.0
    %128 = vmatprep.subr.mxu0 0.0
    %129 = vmatpush1.msra.mxu0 0.0
    %130 = vmatprep.subr.mxu0 0.0
    %131 = vmatpush1.msra.mxu0 0.0
    %132 = vmatprep.subr.mxu0 0.0
    %133 = vmatpush1.msra.mxu0 0.0
    %134 = vmatprep.subr.mxu0 0.0
    %135 = vmatpush1.msra.mxu0 0.0
    %136 = vmatprep.subr.mxu0 0.0
    %137 = vmatpush1.msra.mxu0 0.0
    %138 = vmatprep.subr.mxu0 0.0
    %139 = vmatpush1.msra.mxu0 0.0
    %140 = vmatprep.subr.mxu0 0.0
    %141 = vmatpush1.msra.mxu0 0.0
    %142 = vmatprep.subr.mxu0 0.0
    %143 = vmatpush1.msra.mxu0 0.0
    %144 = vmatprep.subr.mxu0 0.0
    %145 = vmatpush1.msra.mxu0 0.0
    %146 = vmatprep.subr.mxu0 0.0
    %147 = vmatpush1.msra.mxu0 0.0
    %148 = vmatprep.subr.mxu0 0.0
    %149 = vmatpush1.msra.mxu0 0.0
    %150 = vmatprep.subr.mxu0 0.0
    %151 = vmatpush1.msra.mxu0 0.0
    %152 = vmatprep.subr.mxu0 0.0
    %153 = vmatpush1.msra.mxu0 0.0
    %154 = vmatprep.subr.mxu0 0.0
    %155 = vmatpush1.msra.mxu0 0.0
    %156 = vmatprep.subr.mxu0 0.0
    %157 = vmatpush1.msra.mxu0 0.0
    %158 = vmatprep.subr.mxu0 0.0
    %159 = vmatpush1.msra.mxu0 0.0
    %160 = vmatprep.subr.mxu0 0.0
    %161 = vmatpush1.msra.mxu0 0.0
    %162 = vmatprep.subr.mxu0 0.0
    %163 = vmatpush1.msra.mxu0 0.0
    %164 = vmatprep.subr.mxu0 0.0
    %165 = vmatpush1.msra.mxu0 0.0
    %166 = vmatprep.subr.mxu0 0.0
    %167 = vmatpush1.msra.mxu0 0.0
    %168 = vmatprep.subr.mxu0 0.0
    %169 = vmatpush1.msra.mxu0 0.0
    %170 = vmatprep.subr.mxu0 0.0
    %171 = vmatpush1.msra.mxu0 0.0
    %172 = vmatprep.mubr.f32.mxu0 0.0
    %173 = vmatmul.mubr.f32.gmra.mrb[0].mxu0 %v103
    %v174 = vpop.f32.mrb[0].mxu0
    %v175 = vadd.f32 %v99, %v174
    %v176 = vpop.f32.mrb[0].mxu0
    %177 = vmatprep.mubr.f32.mxu0 0.0
    %178 = vmatmul.mubr.f32.gmra.mrb[0].mxu0 %v106
    %v179 = vpop.f32.mrb[0].mxu0
    %v180 = vadd.f32 %v99, %v179
    %v181 = vpop.f32.mrb[0].mxu0
    %182 = vdwg.mxu0
    %v183 = vmul.f32 %v175, %v89
    %v184 = vmul.f32 %v180, %v89
    %v185 = vmul.f32 %v79, %v89
    %v186 = vmul.f32 %v80, %v89
    %v187 = vmul.f32 %v81, %v89
    %v188 = vmul.f32 %v82, %v89
    %vm189 = vcmask 261120
    %v191 = vsel %vm189, 0.0, 0
    %193 = vmatprep.subr.mxu0 0.0
    %194 = vmatpush1.msra.mxu0 %v185
    %195 = vmatprep.subr.mxu0 0.0
    %196 = vmatpush1.msra.mxu0 %v186
    %197 = vmatprep.subr.mxu0 0.0
    %198 = vmatpush1.msra.mxu0 %v187
    %199 = vmatprep.subr.mxu0 0.0
    %200 = vmatpush1.msra.mxu0 %v188
    %201 = vmatprep.subr.mxu0 0.0
    %202 = vmatpush1.msra.mxu0 0.0
    %203 = vmatprep.subr.mxu0 0.0
    %204 = vmatpush1.msra.mxu0 0.0
    %205 = vmatprep.subr.mxu0 0.0
    %206 = vmatpush1.msra.mxu0 0.0
    %207 = vmatprep.subr.mxu0 0.0
    %208 = vmatpush1.msra.mxu0 0.0
    %209 = vmatprep.subr.mxu0 0.0
    %210 = vmatpush1.msra.mxu0 0.0
    %211 = vmatprep.subr.mxu0 0.0
    %212 = vmatpush1.msra.mxu0 0.0
    %213 = vmatprep.subr.mxu0 0.0
    %214 = vmatpush1.msra.mxu0 0.0
    %215 = vmatprep.subr.mxu0 0.0
    %216 = vmatpush1.msra.mxu0 0.0
    %217 = vmatprep.subr.mxu0 0.0
    %218 = vmatpush1.msra.mxu0 0.0
    %219 = vmatprep.subr.mxu0 0.0
    %220 = vmatpush1.msra.mxu0 0.0
    %221 = vmatprep.subr.mxu0 0.0
    %222 = vmatpush1.msra.mxu0 0.0
    %223 = vmatprep.subr.mxu0 0.0
    %224 = vmatpush1.msra.mxu0 0.0
    %225 = vmatprep.subr.mxu0 0.0
    %226 = vmatpush1.msra.mxu0 0.0
    %227 = vmatprep.subr.mxu0 0.0
    %228 = vmatpush1.msra.mxu0 0.0
    %229 = vmatprep.subr.mxu0 0.0
    %230 = vmatpush1.msra.mxu0 0.0
    %231 = vmatprep.subr.mxu0 0.0
    %232 = vmatpush1.msra.mxu0 0.0
    %233 = vmatprep.subr.mxu0 0.0
    %234 = vmatpush1.msra.mxu0 0.0
    %235 = vmatprep.subr.mxu0 0.0
    %236 = vmatpush1.msra.mxu0 0.0
    %237 = vmatprep.subr.mxu0 0.0
    %238 = vmatpush1.msra.mxu0 0.0
    %239 = vmatprep.subr.mxu0 0.0
    %240 = vmatpush1.msra.mxu0 0.0
    %241 = vmatprep.subr.mxu0 0.0
    %242 = vmatpush1.msra.mxu0 0.0
    %243 = vmatprep.subr.mxu0 0.0
    %244 = vmatpush1.msra.mxu0 0.0
    %245 = vmatprep.subr.mxu0 0.0
    %246 = vmatpush1.msra.mxu0 0.0
    %247 = vmatprep.subr.mxu0 0.0
    %248 = vmatpush1.msra.mxu0 0.0
    %249 = vmatprep.subr.mxu0 0.0
    %250 = vmatpush1.msra.mxu0 0.0
    %251 = vmatprep.subr.mxu0 0.0
    %252 = vmatpush1.msra.mxu0 0.0
    %253 = vmatprep.subr.mxu0 0.0
    %254 = vmatpush1.msra.mxu0 0.0
    %255 = vmatprep.subr.mxu0 0.0
    %256 = vmatpush1.msra.mxu0 0.0
    %257 = vmatprep.mubr.f32.mxu0 0.0
    %258 = vmatmul.mubr.f32.gmra.mrb[0].mxu0 %v191
    %v259 = vpop.f32.mrb[0].mxu0
    %v260 = vadd.f32 0.0, %v259
    %v261 = vpop.f32.mrb[0].mxu0
    %262 = vdwg.mxu0
    %v263 = vadd.f32 %v183, %v260
    %v264 = vtanh.pop %v263
    %v265 = vmul.f32 %v264, %v89
    %v266 = vadd.f32 %v265, %v90
    %v267 = vmul.f32 %v266, 0.0
    %269 = vrot.lane.b32.xlu0 %v266, 64
    %v270 = vpop.permute.xlu0 %269
    %v272 = vmul.f32 %v266, %v270
    %274 = vrot.lane.b32.xlu0 %v272, 32
    %v275 = vpop.permute.xlu0 %274
    %v277 = vadd.f32 %v267, %v275
    %v278 = vtanh.pop %v277
    %280 = vrot.lane.b32.xlu0 %v278, 64
    %v281 = vpop.permute.xlu0 %280
    %v283 = vmul.f32 %v266, %v281
    %285 = vrot.lane.b32.xlu0 %v283, 32
    %v286 = vpop.permute.xlu0 %285
    %v287 = vsel %vm189, %v286, 0
    %289 = vmatprep.subr.mxu0 0.0
    %290 = vmatpush1.msra.mxu0 %v185
    %291 = vmatprep.subr.mxu0 0.0
    %292 = vmatpush1.msra.mxu0 %v186
    %293 = vmatprep.subr.mxu0 0.0
    %294 = vmatpush1.msra.mxu0 %v187
    %295 = vmatprep.subr.mxu0 0.0
    %296 = vmatpush1.msra.mxu0 %v188
    %297 = vmatprep.subr.mxu0 0.0
    %298 = vmatpush1.msra.mxu0 0.0
    %299 = vmatprep.subr.mxu0 0.0
    %300 = vmatpush1.msra.mxu0 0.0
    %301 = vmatprep.subr.mxu0 0.0
    %302 = vmatpush1.msra.mxu0 0.0
    %303 = vmatprep.subr.mxu0 0.0
    %304 = vmatpush1.msra.mxu0 0.0
    %305 = vmatprep.subr.mxu0 0.0
    %306 = vmatpush1.msra.mxu0 0.0
    %307 = vmatprep.subr.mxu0 0.0
    %308 = vmatpush1.msra.mxu0 0.0
    %309 = vmatprep.subr.mxu0 0.0
    %310 = vmatpush1.msra.mxu0 0.0
    %311 = vmatprep.subr.mxu0 0.0
    %312 = vmatpush1.msra.mxu0 0.0
    %313 = vmatprep.subr.mxu0 0.0
    %314 = vmatpush1.msra.mxu0 0.0
    %315 = vmatprep.subr.mxu0 0.0
    %316 = vmatpush1.msra.mxu0 0.0
    %317 = vmatprep.subr.mxu0 0.0
    %318 = vmatpush1.msra.mxu0 0.0
    %319 = vmatprep.subr.mxu0 0.0
    %320 = vmatpush1.msra.mxu0 0.0
    %321 = vmatprep.subr.mxu0 0.0
    %322 = vmatpush1.msra.mxu0 0.0
    %323 = vmatprep.subr.mxu0 0.0
    %324 = vmatpush1.msra.mxu0 0.0
    %325 = vmatprep.subr.mxu0 0.0
    %326 = vmatpush1.msra.mxu0 0.0
    %327 = vmatprep.subr.mxu0 0.0
    %328 = vmatpush1.msra.mxu0 0.0
    %329 = vmatprep.subr.mxu0 0.0
    %330 = vmatpush1.msra.mxu0 0.0
    %331 = vmatprep.subr.mxu0 0.0
    %332 = vmatpush1.msra.mxu0 0.0
    %333 = vmatprep.subr.mxu0 0.0
    %334 = vmatpush1.msra.mxu0 0.0
    %335 = vmatprep.subr.mxu0 0.0
    %336 = vmatpush1.msra.mxu0 0.0
    %337 = vmatprep.subr.mxu0 0.0
    %338 = vmatpush1.msra.mxu0 0.0
    %339 = vmatprep.subr.mxu0 0.0
    %340 = vmatpush1.msra.mxu0 0.0
    %341 = vmatprep.subr.mxu0 0.0
    %342 = vmatpush1.msra.mxu0 0.0
    %343 = vmatprep.subr.mxu0 0.0
    %344 = vmatpush1.msra.mxu0 0.0
    %345 = vmatprep.subr.mxu0 0.0
    %346 = vmatpush1.msra.mxu0 0.0
    %347 = vmatprep.subr.mxu0 0.0
    %348 = vmatpush1.msra.mxu0 0.0
    %349 = vmatprep.subr.mxu0 0.0
    %350 = vmatpush1.msra.mxu0 0.0
    %351 = vmatprep.subr.mxu0 0.0
    %352 = vmatpush1.msra.mxu0 0.0
    %353 = vmatprep.mubr.f32.mxu0 0.0
    %354 = vmatmul.mubr.f32.gmra.mrb[0].mxu0 %v287
    %v355 = vpop.f32.mrb[0].mxu0
    %v356 = vadd.f32 0.0, %v355
    %v357 = vpop.f32.mrb[0].mxu0
    %358 = vdwg.mxu0
    %v360 = vrot.slane %v356, 6
    %v362 = vadd.f32 %v183, %v360
    %v363 = vtanh.pop %v362
    %v364 = vmul.f32 %v363, %v89
    %v365 = vadd.f32 %v364, %v90
    %v367 = vrot.slane %v277, 6
    %v369 = vmul.f32 %v365, %v367
    %371 = vrot.lane.b32.xlu0 %v365, 64
    %v372 = vpop.permute.xlu0 %371
    %v374 = vmul.f32 %v365, %v372
    %376 = vrot.lane.b32.xlu0 %v374, 32
    %v377 = vpop.permute.xlu0 %376
    %v379 = vadd.f32 %v369, %v377
    %v380 = vtanh.pop %v379
    %382 = vrot.lane.b32.xlu0 %v380, 64
    %v383 = vpop.permute.xlu0 %382
    %v385 = vmul.f32 %v365, %v383
    %v387 = vrot.slane %v385, 2
    %388 = vrot.lane.b32.xlu0 %v387, 32
    %v389 = vpop.permute.xlu0 %388
    %v390 = vsel %vm189, %v389, 0
    %392 = vmatprep.subr.mxu0 0.0
    %393 = vmatpush1.msra.mxu0 %v185
    %394 = vmatprep.subr.mxu0 0.0
    %395 = vmatpush1.msra.mxu0 %v186
    %396 = vmatprep.subr.mxu0 0.0
    %397 = vmatpush1.msra.mxu0 %v187
    %398 = vmatprep.subr.mxu0 0.0
    %399 = vmatpush1.msra.mxu0 %v188
    %400 = vmatprep.subr.mxu0 0.0
    %401 = vmatpush1.msra.mxu0 0.0
    %402 = vmatprep.subr.mxu0 0.0
    %403 = vmatpush1.msra.mxu0 0.0
    %404 = vmatprep.subr.mxu0 0.0
    %405 = vmatpush1.msra.mxu0 0.0
    %406 = vmatprep.subr.mxu0 0.0
    %407 = vmatpush1.msra.mxu0 0.0
    %408 = vmatprep.subr.mxu0 0.0
    %409 = vmatpush1.msra.mxu0 0.0
    %410 = vmatprep.subr.mxu0 0.0
    %411 = vmatpush1.msra.mxu0 0.0
    %412 = vmatprep.subr.mxu0 0.0
    %413 = vmatpush1.msra.mxu0 0.0
    %414 = vmatprep.subr.mxu0 0.0
    %415 = vmatpush1.msra.mxu0 0.0
    %416 = vmatprep.subr.mxu0 0.0
    %417 = vmatpush1.msra.mxu0 0.0
    %418 = vmatprep.subr.mxu0 0.0
    %419 = vmatpush1.msra.mxu0 0.0
    %420 = vmatprep.subr.mxu0 0.0
    %421 = vmatpush1.msra.mxu0 0.0
    %422 = vmatprep.subr.mxu0 0.0
    %423 = vmatpush1.msra.mxu0 0.0
    %424 = vmatprep.subr.mxu0 0.0
    %425 = vmatpush1.msra.mxu0 0.0
    %426 = vmatprep.subr.mxu0 0.0
    %427 = vmatpush1.msra.mxu0 0.0
    %428 = vmatprep.subr.mxu0 0.0
    %429 = vmatpush1.msra.mxu0 0.0
    %430 = vmatprep.subr.mxu0 0.0
    %431 = vmatpush1.msra.mxu0 0.0
    %432 = vmatprep.subr.mxu0 0.0
    %433 = vmatpush1.msra.mxu0 0.0
    %434 = vmatprep.subr.mxu0 0.0
    %435 = vmatpush1.msra.mxu0 0.0
    %436 = vmatprep.subr.mxu0 0.0
    %437 = vmatpush1.msra.mxu0 0.0
    %438 = vmatprep.subr.mxu0 0.0
    %439 = vmatpush1.msra.mxu0 0.0
    %440 = vmatprep.subr.mxu0 0.0
    %441 = vmatpush1.msra.mxu0 0.0
    %442 = vmatprep.subr.mxu0 0.0
    %443 = vmatpush1.msra.mxu0 0.0
    %444 = vmatprep.subr.mxu0 0.0
    %445 = vmatpush1.msra.mxu0 0.0
    %446 = vmatprep.subr.mxu0 0.0
    %447 = vmatpush1.msra.mxu0 0.0
    %448 = vmatprep.subr.mxu0 0.0
    %449 = vmatpush1.msra.mxu0 0.0
    %450 = vmatprep.subr.mxu0 0.0
    %451 = vmatpush1.msra.mxu0 0.0
    %452 = vmatprep.subr.mxu0 0.0
    %453 = vmatpush1.msra.mxu0 0.0
    %454 = vmatprep.subr.mxu0 0.0
    %455 = vmatpush1.msra.mxu0 0.0
    %456 = vmatprep.mubr.f32.mxu0 0.0
    %457 = vmatmul.mubr.f32.gmra.mrb[0].mxu0 %v390
    %v458 = vpop.f32.mrb[0].mxu0
    %v459 = vadd.f32 0.0, %v458
    %v460 = vpop.f32.mrb[0].mxu0
    %461 = vdwg.mxu0
    %v463 = vrot.slane %v459, 4
    %v465 = vadd.f32 %v183, %v463
    %v466 = vtanh.pop %v465
    %v467 = vmul.f32 %v466, %v89
    %v468 = vadd.f32 %v467, %v90
    %v470 = vrot.slane %v379, 6
    %v472 = vmul.f32 %v468, %v470
    %474 = vrot.lane.b32.xlu0 %v468, 64
    %v475 = vpop.permute.xlu0 %474
    %v477 = vmul.f32 %v468, %v475
    %479 = vrot.lane.b32.xlu0 %v477, 32
    %v480 = vpop.permute.xlu0 %479
    %v482 = vadd.f32 %v472, %v480
    %v483 = vtanh.pop %v482
    %485 = vrot.lane.b32.xlu0 %v483, 64
    %v486 = vpop.permute.xlu0 %485
    %v488 = vmul.f32 %v468, %v486
    %v490 = vrot.slane %v488, 4
    %491 = vrot.lane.b32.xlu0 %v490, 32
    %v492 = vpop.permute.xlu0 %491
    %v493 = vsel %vm189, %v492, 0
    %495 = vmatprep.subr.mxu0 0.0
    %496 = vmatpush1.msra.mxu0 %v185
    %497 = vmatprep.subr.mxu0 0.0
    %498 = vmatpush1.msra.mxu0 %v186
    %499 = vmatprep.subr.mxu0 0.0
    %500 = vmatpush1.msra.mxu0 %v187
    %501 = vmatprep.subr.mxu0 0.0
    %502 = vmatpush1.msra.mxu0 %v188
    %503 = vmatprep.subr.mxu0 0.0
    %504 = vmatpush1.msra.mxu0 0.0
    %505 = vmatprep.subr.mxu0 0.0
    %506 = vmatpush1.msra.mxu0 0.0
    %507 = vmatprep.subr.mxu0 0.0
    %508 = vmatpush1.msra.mxu0 0.0
    %509 = vmatprep.subr.mxu0 0.0
    %510 = vmatpush1.msra.mxu0 0.0
    %511 = vmatprep.subr.mxu0 0.0
    %512 = vmatpush1.msra.mxu0 0.0
    %513 = vmatprep.subr.mxu0 0.0
    %514 = vmatpush1.msra.mxu0 0.0
    %515 = vmatprep.subr.mxu0 0.0
    %516 = vmatpush1.msra.mxu0 0.0
    %517 = vmatprep.subr.mxu0 0.0
    %518 = vmatpush1.msra.mxu0 0.0
    %519 = vmatprep.subr.mxu0 0.0
    %520 = vmatpush1.msra.mxu0 0.0
    %521 = vmatprep.subr.mxu0 0.0
    %522 = vmatpush1.msra.mxu0 0.0
    %523 = vmatprep.subr.mxu0 0.0
    %524 = vmatpush1.msra.mxu0 0.0
    %525 = vmatprep.subr.mxu0 0.0
    %526 = vmatpush1.msra.mxu0 0.0
    %527 = vmatprep.subr.mxu0 0.0
    %528 = vmatpush1.msra.mxu0 0.0
    %529 = vmatprep.subr.mxu0 0.0
    %530 = vmatpush1.msra.mxu0 0.0
    %531 = vmatprep.subr.mxu0 0.0
    %532 = vmatpush1.msra.mxu0 0.0
    %533 = vmatprep.subr.mxu0 0.0
    %534 = vmatpush1.msra.mxu0 0.0
    %535 = vmatprep.subr.mxu0 0.0
    %536 = vmatpush1.msra.mxu0 0.0
    %537 = vmatprep.subr.mxu0 0.0
    %538 = vmatpush1.msra.mxu0 0.0
    %539 = vmatprep.subr.mxu0 0.0
    %540 = vmatpush1.msra.mxu0 0.0
    %541 = vmatprep.subr.mxu0 0.0
    %542 = vmatpush1.msra.mxu0 0.0
    %543 = vmatprep.subr.mxu0 0.0
    %544 = vmatpush1.msra.mxu0 0.0
    %545 = vmatprep.subr.mxu0 0.0
    %546 = vmatpush1.msra.mxu0 0.0
    %547 = vmatprep.subr.mxu0 0.0
    %548 = vmatpush1.msra.mxu0 0.0
    %549 = vmatprep.subr.mxu0 0.0
    %550 = vmatpush1.msra.mxu0 0.0
    %551 = vmatprep.subr.mxu0 0.0
    %552 = vmatpush1.msra.mxu0 0.0
    %553 = vmatprep.subr.mxu0 0.0
    %554 = vmatpush1.msra.mxu0 0.0
    %555 = vmatprep.subr.mxu0 0.0
    %556 = vmatpush1.msra.mxu0 0.0
    %557 = vmatprep.subr.mxu0 0.0
    %558 = vmatpush1.msra.mxu0 0.0
    %559 = vmatprep.mubr.f32.mxu0 0.0
    %560 = vmatmul.mubr.f32.gmra.mrb[0].mxu0 %v493
    %v561 = vpop.f32.mrb[0].mxu0
    %v562 = vadd.f32 0.0, %v561
    %v563 = vpop.f32.mrb[0].mxu0
    %564 = vdwg.mxu0
    %v566 = vrot.slane %v562, 2
    %v568 = vadd.f32 %v183, %v566
    %v569 = vtanh.pop %v568
    %v570 = vmul.f32 %v569, %v89
    %v571 = vadd.f32 %v570, %v90
    %v573 = vrot.slane %v482, 6
    %v575 = vmul.f32 %v571, %v573
    %577 = vrot.lane.b32.xlu0 %v571, 64
    %v578 = vpop.permute.xlu0 %577
    %v580 = vmul.f32 %v571, %v578
    %582 = vrot.lane.b32.xlu0 %v580, 32
    %v583 = vpop.permute.xlu0 %582
    %v585 = vadd.f32 %v575, %v583
    %v586 = vtanh.pop %v585
    %588 = vrot.lane.b32.xlu0 %v586, 64
    %v589 = vpop.permute.xlu0 %588
    %v591 = vmul.f32 %v571, %v589
    %v593 = vrot.slane %v591, 6
    %594 = vrot.lane.b32.xlu0 %v593, 32
    %v595 = vpop.permute.xlu0 %594
    %v596 = vsel %vm189, %v595, 0
    %598 = vmatprep.subr.mxu0 0.0
    %599 = vmatpush1.msra.mxu0 %v185
    %600 = vmatprep.subr.mxu0 0.0
    %601 = vmatpush1.msra.mxu0 %v186
    %602 = vmatprep.subr.mxu0 0.0
    %603 = vmatpush1.msra.mxu0 %v187
    %604 = vmatprep.subr.mxu0 0.0
    %605 = vmatpush1.msra.mxu0 %v188
    %606 = vmatprep.subr.mxu0 0.0
    %607 = vmatpush1.msra.mxu0 0.0
    %608 = vmatprep.subr.mxu0 0.0
    %609 = vmatpush1.msra.mxu0 0.0
    %610 = vmatprep.subr.mxu0 0.0
    %611 = vmatpush1.msra.mxu0 0.0
    %612 = vmatprep.subr.mxu0 0.0
    %613 = vmatpush1.msra.mxu0 0.0
    %614 = vmatprep.subr.mxu0 0.0
    %615 = vmatpush1.msra.mxu0 0.0
    %616 = vmatprep.subr.mxu0 0.0
    %617 = vmatpush1.msra.mxu0 0.0
    %618 = vmatprep.subr.mxu0 0.0
    %619 = vmatpush1.msra.mxu0 0.0
    %620 = vmatprep.subr.mxu0 0.0
    %621 = vmatpush1.msra.mxu0 0.0
    %622 = vmatprep.subr.mxu0 0.0
    %623 = vmatpush1.msra.mxu0 0.0
    %624 = vmatprep.subr.mxu0 0.0
    %625 = vmatpush1.msra.mxu0 0.0
    %626 = vmatprep.subr.mxu0 0.0
    %627 = vmatpush1.msra.mxu0 0.0
    %628 = vmatprep.subr.mxu0 0.0
    %629 = vmatpush1.msra.mxu0 0.0
    %630 = vmatprep.subr.mxu0 0.0
    %631 = vmatpush1.msra.mxu0 0.0
    %632 = vmatprep.subr.mxu0 0.0
    %633 = vmatpush1.msra.mxu0 0.0
    %634 = vmatprep.subr.mxu0 0.0
    %635 = vmatpush1.msra.mxu0 0.0
    %636 = vmatprep.subr.mxu0 0.0
    %637 = vmatpush1.msra.mxu0 0.0
    %638 = vmatprep.subr.mxu0 0.0
    %639 = vmatpush1.msra.mxu0 0.0
    %640 = vmatprep.subr.mxu0 0.0
    %641 = vmatpush1.msra.mxu0 0.0
    %642 = vmatprep.subr.mxu0 0.0
    %643 = vmatpush1.msra.mxu0 0.0
    %644 = vmatprep.subr.mxu0 0.0
    %645 = vmatpush1.msra.mxu0 0.0
    %646 = vmatprep.subr.mxu0 0.0
    %647 = vmatpush1.msra.mxu0 0.0
    %648 = vmatprep.subr.mxu0 0.0
    %649 = vmatpush1.msra.mxu0 0.0
    %650 = vmatprep.subr.mxu0 0.0
    %651 = vmatpush1.msra.mxu0 0.0
    %652 = vmatprep.subr.mxu0 0.0
    %653 = vmatpush1.msra.mxu0 0.0
    %654 = vmatprep.subr.mxu0 0.0
    %655 = vmatpush1.msra.mxu0 0.0
    %656 = vmatprep.subr.mxu0 0.0
    %657 = vmatpush1.msra.mxu0 0.0
    %658 = vmatprep.subr.mxu0 0.0
    %659 = vmatpush1.msra.mxu0 0.0
    %660 = vmatprep.subr.mxu0 0.0
    %661 = vmatpush1.msra.mxu0 0.0
    %662 = vmatprep.mubr.f32.mxu0 0.0
    %663 = vmatmul.mubr.f32.gmra.mrb[0].mxu0 %v596
    %v664 = vpop.f32.mrb[0].mxu0
    %v665 = vadd.f32 0.0, %v664
    %v666 = vpop.f32.mrb[0].mxu0
    %667 = vdwg.mxu0
    %v668 = vadd.f32 %v184, %v665
    %v669 = vtanh.pop %v668
    %v670 = vmul.f32 %v669, %v89
    %v671 = vadd.f32 %v670, %v90
    %v673 = vrot.slane %v585, 6
    %v675 = vmul.f32 %v671, %v673
    %677 = vrot.lane.b32.xlu0 %v671, 64
    %v678 = vpop.permute.xlu0 %677
    %v680 = vmul.f32 %v671, %v678
    %682 = vrot.lane.b32.xlu0 %v680, 32
    %v683 = vpop.permute.xlu0 %682
    %v685 = vadd.f32 %v675, %v683
    %v686 = vtanh.pop %v685
    %688 = vrot.lane.b32.xlu0 %v686, 64
    %v689 = vpop.permute.xlu0 %688
    %v691 = vmul.f32 %v671, %v689
    %693 = vrot.lane.b32.xlu0 %v691, 32
    %v694 = vpop.permute.xlu0 %693
    %v695 = vsel %vm189, %v694, 0
    %697 = vmatprep.subr.mxu0 0.0
    %698 = vmatpush1.msra.mxu0 %v185
    %699 = vmatprep.subr.mxu0 0.0
    %700 = vmatpush1.msra.mxu0 %v186
    %701 = vmatprep.subr.mxu0 0.0
    %702 = vmatpush1.msra.mxu0 %v187
    %703 = vmatprep.subr.mxu0 0.0
    %704 = vmatpush1.msra.mxu0 %v188
    %705 = vmatprep.subr.mxu0 0.0
    %706 = vmatpush1.msra.mxu0 0.0
    %707 = vmatprep.subr.mxu0 0.0
    %708 = vmatpush1.msra.mxu0 0.0
    %709 = vmatprep.subr.mxu0 0.0
    %710 = vmatpush1.msra.mxu0 0.0
    %711 = vmatprep.subr.mxu0 0.0
    %712 = vmatpush1.msra.mxu0 0.0
    %713 = vmatprep.subr.mxu0 0.0
    %714 = vmatpush1.msra.mxu0 0.0
    %715 = vmatprep.subr.mxu0 0.0
    %716 = vmatpush1.msra.mxu0 0.0
    %717 = vmatprep.subr.mxu0 0.0
    %718 = vmatpush1.msra.mxu0 0.0
    %719 = vmatprep.subr.mxu0 0.0
    %720 = vmatpush1.msra.mxu0 0.0
    %721 = vmatprep.subr.mxu0 0.0
    %722 = vmatpush1.msra.mxu0 0.0
    %723 = vmatprep.subr.mxu0 0.0
    %724 = vmatpush1.msra.mxu0 0.0
    %725 = vmatprep.subr.mxu0 0.0
    %726 = vmatpush1.msra.mxu0 0.0
    %727 = vmatprep.subr.mxu0 0.0
    %728 = vmatpush1.msra.mxu0 0.0
    %729 = vmatprep.subr.mxu0 0.0
    %730 = vmatpush1.msra.mxu0 0.0
    %731 = vmatprep.subr.mxu0 0.0
    %732 = vmatpush1.msra.mxu0 0.0
    %733 = vmatprep.subr.mxu0 0.0
    %734 = vmatpush1.msra.mxu0 0.0
    %735 = vmatprep.subr.mxu0 0.0
    %736 = vmatpush1.msra.mxu0 0.0
    %737 = vmatprep.subr.mxu0 0.0
    %738 = vmatpush1.msra.mxu0 0.0
    %739 = vmatprep.subr.mxu0 0.0
    %740 = vmatpush1.msra.mxu0 0.0
    %741 = vmatprep.subr.mxu0 0.0
    %742 = vmatpush1.msra.mxu0 0.0
    %743 = vmatprep.subr.mxu0 0.0
    %744 = vmatpush1.msra.mxu0 0.0
    %745 = vmatprep.subr.mxu0 0.0
    %746 = vmatpush1.msra.mxu0 0.0
    %747 = vmatprep.subr.mxu0 0.0
    %748 = vmatpush1.msra.mxu0 0.0
    %749 = vmatprep.subr.mxu0 0.0
    %750 = vmatpush1.msra.mxu0 0.0
    %751 = vmatprep.subr.mxu0 0.0
    %752 = vmatpush1.msra.mxu0 0.0
    %753 = vmatprep.subr.mxu0 0.0
    %754 = vmatpush1.msra.mxu0 0.0
    %755 = vmatprep.subr.mxu0 0.0
    %756 = vmatpush1.msra.mxu0 0.0
    %757 = vmatprep.subr.mxu0 0.0
    %758 = vmatpush1.msra.mxu0 0.0
    %759 = vmatprep.subr.mxu0 0.0
    %760 = vmatpush1.msra.mxu0 0.0
    %761 = vmatprep.mubr.f32.mxu0 0.0
    %762 = vmatmul.mubr.f32.gmra.mrb[0].mxu0 %v695
    %v763 = vpop.f32.mrb[0].mxu0
    %v764 = vadd.f32 0.0, %v763
    %v765 = vpop.f32.mrb[0].mxu0
    %766 = vdwg.mxu0
    %v768 = vrot.slane %v764, 6
    %v770 = vadd.f32 %v184, %v768
    %v771 = vtanh.pop %v770
    %v772 = vmul.f32 %v771, %v89
    %v773 = vadd.f32 %v772, %v90
    %v775 = vrot.slane %v685, 6
    %v777 = vmul.f32 %v773, %v775
    %779 = vrot.lane.b32.xlu0 %v773, 64
    %v780 = vpop.permute.xlu0 %779
    %v782 = vmul.f32 %v773, %v780
    %784 = vrot.lane.b32.xlu0 %v782, 32
    %v785 = vpop.permute.xlu0 %784
    %v787 = vadd.f32 %v777, %v785
    %v788 = vtanh.pop %v787
    %790 = vrot.lane.b32.xlu0 %v788, 64
    %v791 = vpop.permute.xlu0 %790
    %v793 = vmul.f32 %v773, %v791
    %v795 = vrot.slane %v793, 2
    %796 = vrot.lane.b32.xlu0 %v795, 32
    %v797 = vpop.permute.xlu0 %796
    %v798 = vsel %vm189, %v797, 0
    %800 = vmatprep.subr.mxu0 0.0
    %801 = vmatpush1.msra.mxu0 %v185
    %802 = vmatprep.subr.mxu0 0.0
    %803 = vmatpush1.msra.mxu0 %v186
    %804 = vmatprep.subr.mxu0 0.0
    %805 = vmatpush1.msra.mxu0 %v187
    %806 = vmatprep.subr.mxu0 0.0
    %807 = vmatpush1.msra.mxu0 %v188
    %808 = vmatprep.subr.mxu0 0.0
    %809 = vmatpush1.msra.mxu0 0.0
    %810 = vmatprep.subr.mxu0 0.0
    %811 = vmatpush1.msra.mxu0 0.0
    %812 = vmatprep.subr.mxu0 0.0
    %813 = vmatpush1.msra.mxu0 0.0
    %814 = vmatprep.subr.mxu0 0.0
    %815 = vmatpush1.msra.mxu0 0.0
    %816 = vmatprep.subr.mxu0 0.0
    %817 = vmatpush1.msra.mxu0 0.0
    %818 = vmatprep.subr.mxu0 0.0
    %819 = vmatpush1.msra.mxu0 0.0
    %820 = vmatprep.subr.mxu0 0.0
    %821 = vmatpush1.msra.mxu0 0.0
    %822 = vmatprep.subr.mxu0 0.0
    %823 = vmatpush1.msra.mxu0 0.0
    %824 = vmatprep.subr.mxu0 0.0
    %825 = vmatpush1.msra.mxu0 0.0
    %826 = vmatprep.subr.mxu0 0.0
    %827 = vmatpush1.msra.mxu0 0.0
    %828 = vmatprep.subr.mxu0 0.0
    %829 = vmatpush1.msra.mxu0 0.0
    %830 = vmatprep.subr.mxu0 0.0
    %831 = vmatpush1.msra.mxu0 0.0
    %832 = vmatprep.subr.mxu0 0.0
    %833 = vmatpush1.msra.mxu0 0.0
    %834 = vmatprep.subr.mxu0 0.0
    %835 = vmatpush1.msra.mxu0 0.0
    %836 = vmatprep.subr.mxu0 0.0
    %837 = vmatpush1.msra.mxu0 0.0
    %838 = vmatprep.subr.mxu0 0.0
    %839 = vmatpush1.msra.mxu0 0.0
    %840 = vmatprep.subr.mxu0 0.0
    %841 = vmatpush1.msra.mxu0 0.0
    %842 = vmatprep.subr.mxu0 0.0
    %843 = vmatpush1.msra.mxu0 0.0
    %844 = vmatprep.subr.mxu0 0.0
    %845 = vmatpush1.msra.mxu0 0.0
    %846 = vmatprep.subr.mxu0 0.0
    %847 = vmatpush1.msra.mxu0 0.0
    %848 = vmatprep.subr.mxu0 0.0
    %849 = vmatpush1.msra.mxu0 0.0
    %850 = vmatprep.subr.mxu0 0.0
    %851 = vmatpush1.msra.mxu0 0.0
    %852 = vmatprep.subr.mxu0 0.0
    %853 = vmatpush1.msra.mxu0 0.0
    %854 = vmatprep.subr.mxu0 0.0
    %855 = vmatpush1.msra.mxu0 0.0
    %856 = vmatprep.subr.mxu0 0.0
    %857 = vmatpush1.msra.mxu0 0.0
    %858 = vmatprep.subr.mxu0 0.0
    %859 = vmatpush1.msra.mxu0 0.0
    %860 = vmatprep.subr.mxu0 0.0
    %861 = vmatpush1.msra.mxu0 0.0
    %862 = vmatprep.subr.mxu0 0.0
    %863 = vmatpush1.msra.mxu0 0.0
    %864 = vmatprep.mubr.f32.mxu0 0.0
    %865 = vmatmul.mubr.f32.gmra.mrb[0].mxu0 %v798
    %v866 = vpop.f32.mrb[0].mxu0
    %v867 = vadd.f32 0.0, %v866
    %v868 = vpop.f32.mrb[0].mxu0
    %869 = vdwg.mxu0
    %v871 = vrot.slane %v867, 4
    %v873 = vadd.f32 %v184, %v871
    %v874 = vtanh.pop %v873
    %v875 = vmul.f32 %v874, %v89
    %v876 = vadd.f32 %v875, %v90
    %v878 = vrot.slane %v787, 6
    %v880 = vmul.f32 %v876, %v878
    %882 = vrot.lane.b32.xlu0 %v876, 64
    %v883 = vpop.permute.xlu0 %882
    %v885 = vmul.f32 %v876, %v883
    %887 = vrot.lane.b32.xlu0 %v885, 32
    %v888 = vpop.permute.xlu0 %887
    %v890 = vadd.f32 %v880, %v888
    %v891 = vtanh.pop %v890
    %893 = vrot.lane.b32.xlu0 %v891, 64
    %v894 = vpop.permute.xlu0 %893
    %v896 = vmul.f32 %v876, %v894
    %v898 = vrot.slane %v896, 4
    %899 = vrot.lane.b32.xlu0 %v898, 32
    %v900 = vpop.permute.xlu0 %899
    %v901 = vsel %vm189, %v900, 0
    %903 = vmatprep.subr.mxu0 0.0
    %904 = vmatpush1.msra.mxu0 %v185
    %905 = vmatprep.subr.mxu0 0.0
    %906 = vmatpush1.msra.mxu0 %v186
    %907 = vmatprep.subr.mxu0 0.0
    %908 = vmatpush1.msra.mxu0 %v187
    %909 = vmatprep.subr.mxu0 0.0
    %910 = vmatpush1.msra.mxu0 %v188
    %911 = vmatprep.subr.mxu0 0.0
    %912 = vmatpush1.msra.mxu0 0.0
    %913 = vmatprep.subr.mxu0 0.0
    %914 = vmatpush1.msra.mxu0 0.0
    %915 = vmatprep.subr.mxu0 0.0
    %916 = vmatpush1.msra.mxu0 0.0
    %917 = vmatprep.subr.mxu0 0.0
    %918 = vmatpush1.msra.mxu0 0.0
    %919 = vmatprep.subr.mxu0 0.0
    %920 = vmatpush1.msra.mxu0 0.0
    %921 = vmatprep.subr.mxu0 0.0
    %922 = vmatpush1.msra.mxu0 0.0
    %923 = vmatprep.subr.mxu0 0.0
    %924 = vmatpush1.msra.mxu0 0.0
    %925 = vmatprep.subr.mxu0 0.0
    %926 = vmatpush1.msra.mxu0 0.0
    %927 = vmatprep.subr.mxu0 0.0
    %928 = vmatpush1.msra.mxu0 0.0
    %929 = vmatprep.subr.mxu0 0.0
    %930 = vmatpush1.msra.mxu0 0.0
    %931 = vmatprep.subr.mxu0 0.0
    %932 = vmatpush1.msra.mxu0 0.0
    %933 = vmatprep.subr.mxu0 0.0
    %934 = vmatpush1.msra.mxu0 0.0
    %935 = vmatprep.subr.mxu0 0.0
    %936 = vmatpush1.msra.mxu0 0.0
    %937 = vmatprep.subr.mxu0 0.0
    %938 = vmatpush1.msra.mxu0 0.0
    %939 = vmatprep.subr.mxu0 0.0
    %940 = vmatpush1.msra.mxu0 0.0
    %941 = vmatprep.subr.mxu0 0.0
    %942 = vmatpush1.msra.mxu0 0.0
    %943 = vmatprep.subr.mxu0 0.0
    %944 = vmatpush1.msra.mxu0 0.0
    %945 = vmatprep.subr.mxu0 0.0
    %946 = vmatpush1.msra.mxu0 0.0
    %947 = vmatprep.subr.mxu0 0.0
    %948 = vmatpush1.msra.mxu0 0.0
    %949 = vmatprep.subr.mxu0 0.0
    %950 = vmatpush1.msra.mxu0 0.0
    %951 = vmatprep.subr.mxu0 0.0
    %952 = vmatpush1.msra.mxu0 0.0
    %953 = vmatprep.subr.mxu0 0.0
    %954 = vmatpush1.msra.mxu0 0.0
    %955 = vmatprep.subr.mxu0 0.0
    %956 = vmatpush1.msra.mxu0 0.0
    %957 = vmatprep.subr.mxu0 0.0
    %958 = vmatpush1.msra.mxu0 0.0
    %959 = vmatprep.subr.mxu0 0.0
    %960 = vmatpush1.msra.mxu0 0.0
    %961 = vmatprep.subr.mxu0 0.0
    %962 = vmatpush1.msra.mxu0 0.0
    %963 = vmatprep.subr.mxu0 0.0
    %964 = vmatpush1.msra.mxu0 0.0
    %965 = vmatprep.subr.mxu0 0.0
    %966 = vmatpush1.msra.mxu0 0.0
    %967 = vmatprep.mubr.f32.mxu0 0.0
    %968 = vmatmul.mubr.f32.gmra.mrb[0].mxu0 %v901
    %v969 = vpop.f32.mrb[0].mxu0
    %v970 = vadd.f32 0.0, %v969
    %v971 = vpop.f32.mrb[0].mxu0
    %972 = vdwg.mxu0
    %v974 = vrot.slane %v970, 2
    %v976 = vadd.f32 %v184, %v974
    %v977 = vtanh.pop %v976
    %v978 = vmul.f32 %v977, %v89
    %v979 = vadd.f32 %v978, %v90
    %v981 = vrot.slane %v890, 6
    %v983 = vmul.f32 %v979, %v981
    %985 = vrot.lane.b32.xlu0 %v979, 64
    %v986 = vpop.permute.xlu0 %985
    %v988 = vmul.f32 %v979, %v986
    %990 = vrot.lane.b32.xlu0 %v988, 32
    %v991 = vpop.permute.xlu0 %990
    %v993 = vadd.f32 %v983, %v991
    %v994 = vtanh.pop %v993
    %996 = vrot.lane.b32.xlu0 %v994, 64
    %v997 = vpop.permute.xlu0 %996
    %v999 = vmul.f32 %v979, %v997
    %v1000 = vld [vmem:[#allocation8] sm:$0xff]
    %v1001 = vld [vmem:[#allocation8 + $0x8] sm:$0xff]
    %v1002 = vld [vmem:[#allocation8 + $0x10] sm:$0xff]
    %v1003 = vld [vmem:[#allocation8 + $0x18] sm:$0xff]
    %v1004 = vld [vmem:[%s5] sm:$0x1]
    %v1006 = vlaneseq
    %v1007 = vshrl.u32 %v1006, 7
    %v1008 = vsub.s32 0, %v1007
    %v1009 = vrot.slane %v1004, %v1008
    %v1012 = vrot.slane %v999, 6
    %1013 = vrot.lane.b32.xlu0 %v1012, 32
    %v1014 = vpop.permute.xlu0 %1013
    %v1015 = vsel %vm189, %v1014, 0
    %1017 = vmatprep.subr.mxu0 0.0
    %1018 = vmatpush1.msra.mxu0 %v1000
    %1019 = vmatprep.subr.mxu0 0.0
    %1020 = vmatpush1.msra.mxu0 %v1001
    %1021 = vmatprep.subr.mxu0 0.0
    %1022 = vmatpush1.msra.mxu0 %v1002
    %1023 = vmatprep.subr.mxu0 0.0
    %1024 = vmatpush1.msra.mxu0 %v1003
    %1025 = vmatprep.subr.mxu0 0.0
    %1026 = vmatpush1.msra.mxu0 0.0
    %1027 = vmatprep.subr.mxu0 0.0
    %1028 = vmatpush1.msra.mxu0 0.0
    %1029 = vmatprep.subr.mxu0 0.0
    %1030 = vmatpush1.msra.mxu0 0.0
    %1031 = vmatprep.subr.mxu0 0.0
    %1032 = vmatpush1.msra.mxu0 0.0
    %1033 = vmatprep.subr.mxu0 0.0
    %1034 = vmatpush1.msra.mxu0 0.0
    %1035 = vmatprep.subr.mxu0 0.0
    %1036 = vmatpush1.msra.mxu0 0.0
    %1037 = vmatprep.subr.mxu0 0.0
    %1038 = vmatpush1.msra.mxu0 0.0
    %1039 = vmatprep.subr.mxu0 0.0
    %1040 = vmatpush1.msra.mxu0 0.0
    %1041 = vmatprep.subr.mxu0 0.0
    %1042 = vmatpush1.msra.mxu0 0.0
    %1043 = vmatprep.subr.mxu0 0.0
    %1044 = vmatpush1.msra.mxu0 0.0
    %1045 = vmatprep.subr.mxu0 0.0
    %1046 = vmatpush1.msra.mxu0 0.0
    %1047 = vmatprep.subr.mxu0 0.0
    %1048 = vmatpush1.msra.mxu0 0.0
    %1049 = vmatprep.subr.mxu0 0.0
    %1050 = vmatpush1.msra.mxu0 0.0
    %1051 = vmatprep.subr.mxu0 0.0
    %1052 = vmatpush1.msra.mxu0 0.0
    %1053 = vmatprep.subr.mxu0 0.0
    %1054 = vmatpush1.msra.mxu0 0.0
    %1055 = vmatprep.subr.mxu0 0.0
    %1056 = vmatpush1.msra.mxu0 0.0
    %1057 = vmatprep.subr.mxu0 0.0
    %1058 = vmatpush1.msra.mxu0 0.0
    %1059 = vmatprep.subr.mxu0 0.0
    %1060 = vmatpush1.msra.mxu0 0.0
    %1061 = vmatprep.subr.mxu0 0.0
    %1062 = vmatpush1.msra.mxu0 0.0
    %1063 = vmatprep.subr.mxu0 0.0
    %1064 = vmatpush1.msra.mxu0 0.0
    %1065 = vmatprep.subr.mxu0 0.0
    %1066 = vmatpush1.msra.mxu0 0.0
    %1067 = vmatprep.subr.mxu0 0.0
    %1068 = vmatpush1.msra.mxu0 0.0
    %1069 = vmatprep.subr.mxu0 0.0
    %1070 = vmatpush1.msra.mxu0 0.0
    %1071 = vmatprep.subr.mxu0 0.0
    %1072 = vmatpush1.msra.mxu0 0.0
    %1073 = vmatprep.subr.mxu0 0.0
    %1074 = vmatpush1.msra.mxu0 0.0
    %1075 = vmatprep.subr.mxu0 0.0
    %1076 = vmatpush1.msra.mxu0 0.0
    %1077 = vmatprep.subr.mxu0 0.0
    %1078 = vmatpush1.msra.mxu0 0.0
    %1079 = vmatprep.subr.mxu0 0.0
    %1080 = vmatpush1.msra.mxu0 0.0
    %1081 = vmatprep.mubr.f32.mxu0 0.0
    %1082 = vmatmul.mubr.f32.gmra.mrb[0].mxu0 %v1015
    %v1083 = vpop.f32.mrb[0].mxu0
    %v1084 = vadd.f32 %v1009, %v1083
    %v1085 = vpop.f32.mrb[0].mxu0
    %1086 = vdwg.mxu0
    %1087 = vst [vmem:[#allocation10] sm:$0x3] %v1084
    // Predicated region
    $region42: #{tpu_custom_call.1} parent=1 // pred_check
      _
    $region43: #{tpu_custom_call.1} parent=1 // pred_check_branch
      %1089 = sbr.rel (0) target = $region45
    $region44: #{tpu_custom_call.1} parent=1 // pred_region
      %s1091 = ssub.s32 32, 32
      %1092 = vsyncadd [#allocation4], %s1091
      %s1094 = sshll.u32 [#allocation10], 4
      %s1095 = int_to_ptr.vmem [resolvable:$true] %s1094
      %1097 = dma.vmem_to_hbm [thread:$0]  %s1095, 32, %s6, [#allocation4]
    $region45: #{tpu_custom_call.1} parent=1 // pred_fallthru
      _
    // Predicated region
    $region46: #{tpu_custom_call.1} parent=1 // pred_check
      _
    $region47: #{tpu_custom_call.1} parent=1 // pred_check_branch
      %1099 = sbr.rel (0) target = $region49
    $region48: #{tpu_custom_call.1} parent=1 // pred_region
      %1100 = dma.done [#allocation4], 32
    $region49: #{tpu_custom_call.1} parent=1 // pred_fallthru
      _
    %1101 = vsyncpa [#allocation3], 1
    %1102 = vsyncpa [#allocation6], 1
    %1103 = vsyncpa [#allocation9], 1
    %1104 = vsyncpa [#allocation4], 1

</llo_original>
